<compile_context>
chip_gen: v7x
topology: tpu7x:2x2x1
jax: 0.10.0
libtpu: 0.0.40
codegen_flags: <defaults>
</compile_context>

<pallas_src>
import jax
import jax.numpy as jnp
from jax import lax
from jax.experimental import pallas as pl
from jax.experimental.pallas import tpu as pltpu

_LANE = 128
_TARGET_BLOCK_BYTES = 4 << 20   # ~4 MiB x-blocks -> 85%+ of HBM roofline
_VMEM_HEADROOM = 2 << 20
_MIN_TARGET_BYTES = 256 << 10


def _cdiv(a, b):
    return -(-a // b)


def _round_up(a, b):
    return _cdiv(a, b) * b


def _sublane_packing(itemsize):
    # Rows per vreg tile: f32 -> 8, bf16/f16 -> 16, int8/fp8 -> 32.
    return 8 * max(1, 4 // int(itemsize))


def _vmem_cap_bytes():
    try:
        cap = getattr(pltpu.get_tpu_info(), "vmem_capacity_bytes", None)
        if cap:
            return int(cap)
    except Exception:
        pass
    return 64 << 20  # conservative fallback: v7x physical VMEM


def _frozen_bn_kernel(scale_ref, shift_ref, x_ref, o_ref):
    # scale/shift broadcast against x: (tile_r, 1) along lanes (layout A) or
    # (1, tile_l) along sublanes (layout B). Single fused mul+add per vreg.
    x = x_ref[...].astype(jnp.float32)
    o_ref[...] = (x * scale_ref[...] + shift_ref[...]).astype(o_ref.dtype)


def _plan_rows_lanes(R, L, itemsize, sub, target_bytes):
    """(tile_r, tile_l) for an (R, L) view: ~target_bytes per block, tile_r a
    multiple of the sublane packing, tile_l a multiple of 128 (or full L), and
    a few grid steps when the row count allows it (v7x dual-TC sharding)."""
    # Lane tiling: keep the full spatial extent unless even `sub` rows of it
    # would overflow the block budget (very large images).
    if L <= _LANE or sub * L * itemsize <= target_bytes:
        tile_l = L
    else:
        tile_l = (target_bytes // (sub * itemsize)) // _LANE * _LANE
        tile_l = max(_LANE, min(tile_l, (L // _LANE) * _LANE))

    # Row tiling: fill the block up to the byte target.
    tile_r = (target_bytes // (tile_l * itemsize)) // sub * sub
    tile_r = max(sub, tile_r)
    if tile_r >= R:
        tile_r = R

    # Prefer >=4 grid steps on non-trivial inputs so "parallel" shards
    # across both TensorCores on v7x.
    grid_l = _cdiv(L, tile_l)
    sizable = R * L * itemsize >= (1 << 20)
    if _cdiv(R, tile_r) * grid_l < 4 and R > sub and sizable:
        splits = min(_cdiv(4, grid_l), R // sub)
        if splits >= 2:
            tile_r = min(tile_r, _round_up(_cdiv(R, splits), sub))
    return tile_r, tile_l


def _vmem_need_rows_lanes(tile_r, tile_l, itemsize, sub):
    rr = _round_up(tile_r, sub)
    ll = _round_up(tile_l, _LANE)
    x_block = rr * ll * itemsize
    aff_block = rr * _LANE * 4          # (tile_r, 1) f32, lane-padded in VMEM
    return 2 * (2 * x_block + 2 * aff_block)   # double-buffered in + out


def _plan_lanes_only(rows, CL, itemsize, sub, target_bytes):
    """Lane tile for an (rows, CL) view where rows is small and kept whole."""
    rows_pad = _round_up(rows, sub)
    if CL <= _LANE or rows_pad * CL * itemsize <= target_bytes:
        tile_l = CL
    else:
        tile_l = (target_bytes // (rows_pad * itemsize)) // _LANE * _LANE
        tile_l = max(_LANE, min(tile_l, (CL // _LANE) * _LANE))
    # A few lane blocks for v7x dual-TC when the input is big enough.
    sizable = rows_pad * CL * itemsize >= (1 << 20)
    if _cdiv(CL, tile_l) < 4 and CL >= 4 * _LANE and sizable:
        tile_l = min(tile_l, _round_up(_cdiv(CL, 4), _LANE))
    return tile_l


def _vmem_need_lanes_only(rows, tile_l, itemsize, sub):
    rows_pad = _round_up(rows, sub)
    ll = _round_up(tile_l, _LANE)
    x_block = rows_pad * ll * itemsize
    aff_block = 8 * ll * 4              # (1, tile_l) f32, sublane-padded to 8
    return 2 * (2 * x_block + 2 * aff_block)


def frozen_batch_norm_2d(x, weight, bias, running_mean, running_var, eps=1e-5):
    """FrozenBatchNorm2d forward. x: (N, C, H, W); params: (C,)."""
    N, C, H, W = x.shape
    L = H * W
    itemsize = jnp.dtype(x.dtype).itemsize
    sub = _sublane_packing(itemsize)

    # Fold the frozen statistics into a per-channel affine (f32 math).
    f32 = jnp.float32
    scale = weight.astype(f32) * lax.rsqrt(running_var.astype(f32) + f32(eps))
    shift = bias.astype(f32) - running_mean.astype(f32) * scale

    vmem_ceiling = min(48 << 20, (_vmem_cap_bytes() * 3) // 4)

    if L % _LANE == 0:
        # ----- Layout A: rows are (n, c); lanes are the full spatial extent.
        R = N * C
        x2 = x.reshape(R, L)                       # free view (contiguous NCHW)
        scale_rows = jnp.tile(scale, N).reshape(R, 1)   # row r -> channel r % C
        shift_rows = jnp.tile(shift, N).reshape(R, 1)

        target = _TARGET_BLOCK_BYTES
        while True:
            tile_r, tile_l = _plan_rows_lanes(R, L, itemsize, sub, target)
            need = _vmem_need_rows_lanes(tile_r, tile_l, itemsize, sub)
            if need + _VMEM_HEADROOM <= vmem_ceiling or target <= _MIN_TARGET_BYTES:
                break
            target //= 2
        vmem_limit = int(min(vmem_ceiling, max(need + _VMEM_HEADROOM, 16 << 20)))

        grid = (_cdiv(R, tile_r), _cdiv(L, tile_l))
        out = pl.pallas_call(
            _frozen_bn_kernel,
            out_shape=jax.ShapeDtypeStruct((R, L), x.dtype),
            grid=grid,
            in_specs=[
                pl.BlockSpec((tile_r, 1), lambda i, j: (i, 0)),       # scale
                pl.BlockSpec((tile_r, 1), lambda i, j: (i, 0)),       # shift
                pl.BlockSpec((tile_r, tile_l), lambda i, j: (i, j)),  # x slab
            ],
            out_specs=pl.BlockSpec((tile_r, tile_l), lambda i, j: (i, j)),
            compiler_params=pltpu.CompilerParams(
                dimension_semantics=("parallel", "parallel"),
                vmem_limit_bytes=vmem_limit,
            ),
        )(scale_rows, shift_rows, x2)
        return out.reshape(N, C, H, W)

    # ----- Layout B: rows are the batch; lanes concatenate whole channels
    # (keeps stores lane-dense when H*W is not a multiple of 128).
    CL = C * L
    x2 = x.reshape(N, CL)                          # free view (contiguous NCHW)
    scale_lanes = jnp.repeat(scale, L).reshape(1, CL)
    shift_lanes = jnp.repeat(shift, L).reshape(1, CL)

    target = _TARGET_BLOCK_BYTES
    while True:
        tile_l = _plan_lanes_only(N, CL, itemsize, sub, target)
        need = _vmem_need_lanes_only(N, tile_l, itemsize, sub)
        if need + _VMEM_HEADROOM <= vmem_ceiling or target <= _MIN_TARGET_BYTES:
            break
        target //= 2
    vmem_limit = int(min(vmem_ceiling, max(need + _VMEM_HEADROOM, 16 << 20)))

    grid = (_cdiv(CL, tile_l),)
    out = pl.pallas_call(
        _frozen_bn_kernel,
        out_shape=jax.ShapeDtypeStruct((N, CL), x.dtype),
        grid=grid,
        in_specs=[
            pl.BlockSpec((1, tile_l), lambda j: (0, j)),   # per-lane scale
            pl.BlockSpec((1, tile_l), lambda j: (0, j)),   # per-lane shift
            pl.BlockSpec((N, tile_l), lambda j: (0, j)),   # x slab
        ],
        out_specs=pl.BlockSpec((N, tile_l), lambda j: (0, j)),
        compiler_params=pltpu.CompilerParams(
            dimension_semantics=("parallel",),
            vmem_limit_bytes=vmem_limit,
        ),
    )(scale_lanes, shift_lanes, x2)
    return out.reshape(N, C, H, W)


def _reference(x, weight, bias, running_mean, running_var):
    w = weight.reshape(1, -1, 1, 1)
    b = bias.reshape(1, -1, 1, 1)
    rv = running_var.reshape(1, -1, 1, 1)
    rm = running_mean.reshape(1, -1, 1, 1)
    eps = 1e-5
    scale = w * lax.rsqrt(rv + eps)
    bias_ = b - rm * scale
    return x.astype(jnp.float32) * scale + bias_


if __name__ == "__main__":
    key = jax.random.PRNGKey(0)
    kx, kw, kb, km, kv, kx2 = jax.random.split(key, 6)

    def make_params(C):
        weight = jnp.ones((C,), jnp.float32) + 0.1 * jax.random.normal(kw, (C,), jnp.float32)
        bias = 0.1 * jax.random.normal(kb, (C,), jnp.float32)
        running_mean = 0.1 * jax.random.normal(km, (C,), jnp.float32)
        running_var = jnp.ones((C,), jnp.float32) + 0.1 * jnp.abs(
            jax.random.normal(kv, (C,), jnp.float32))
        return weight, bias, running_mean, running_var

    # Case 1: lane-dense layout A (H*W % 128 == 0), f32.
    N, C, H, W = 2, 4, 16, 16
    x = jax.random.normal(kx, (N, C, H, W), dtype=jnp.float32)
    w_, b_, rm_, rv_ = make_params(C)
    out = jax.block_until_ready(frozen_batch_norm_2d(x, w_, b_, rm_, rv_))
    ref = _reference(x, w_, b_, rm_, rv_)
    assert out.shape == x.shape and out.dtype == x.dtype
    assert jnp.allclose(out, ref, atol=1e-5, rtol=1e-5)

    # Case 2: small-spatial fallback layout B (7x7, H*W % 128 != 0), f32.
    N2, C2, H2, W2 = 2, 6, 7, 7
    x2 = jax.random.normal(kx2, (N2, C2, H2, W2), dtype=jnp.float32)
    w2, b2, rm2, rv2 = make_params(C2)
    out2 = jax.block_until_ready(frozen_batch_norm_2d(x2, w2, b2, rm2, rv2))
    ref2 = _reference(x2, w2, b2, rm2, rv2)
    assert out2.shape == x2.shape and out2.dtype == x2.dtype
    assert jnp.allclose(out2, ref2, atol=1e-5, rtol=1e-5)

    # Case 3: bf16 activations (kernel computes in f32, casts back to bf16).
    xb = x.astype(jnp.bfloat16)
    outb = jax.block_until_ready(frozen_batch_norm_2d(xb, w_, b_, rm_, rv_))
    assert outb.shape == x.shape and outb.dtype == jnp.bfloat16
    assert jnp.allclose(outb.astype(jnp.float32), ref, atol=2e-2, rtol=2e-2)

    print("KERNEL_OK")
</pallas_src>

<mosaic_0001>
module attributes {stable_mosaic.version = 11 : i64} {
  func.func @_frozen_bn_kernel(%arg0: i32, %arg1: i32, %arg2: memref<8x1xf32, #tpu.memory_space<vmem>>, %arg3: memref<8x1xf32, #tpu.memory_space<vmem>>, %arg4: memref<8x256xf32, #tpu.memory_space<vmem>>, %arg5: memref<8x256xf32, #tpu.memory_space<vmem>>) attributes {dimension_semantics = [#tpu.dimension_semantics<parallel>, #tpu.dimension_semantics<parallel>], iteration_bounds = array<i64: 1, 1>, scalar_prefetch = 0 : i64, scratch_operands = 0 : i64, tpu.core_type = #tpu.core_type<tc>, window_params = [{transform_indices = @transform_0, window_bounds = array<i64: 8, 1>}, {transform_indices = @transform_1, window_bounds = array<i64: 8, 1>}, {transform_indices = @transform_2, window_bounds = array<i64: 8, 256>}, {transform_indices = @transform_3, window_bounds = array<i64: 8, 256>}]} {
    %c0 = arith.constant 0 : index
    %c0_0 = arith.constant 0 : index
    %0 = vector.load %arg4[%c0, %c0_0] : memref<8x256xf32, #tpu.memory_space<vmem>>, vector<8x256xf32>
    %c0_1 = arith.constant 0 : index
    %c0_2 = arith.constant 0 : index
    %1 = vector.load %arg2[%c0_1, %c0_2] : memref<8x1xf32, #tpu.memory_space<vmem>>, vector<8x1xf32>
    %2 = vector.broadcast %1 : vector<8x1xf32> to vector<8x256xf32>
    %3 = arith.mulf %0, %2 : vector<8x256xf32>
    %c0_3 = arith.constant 0 : index
    %c0_4 = arith.constant 0 : index
    %4 = vector.load %arg3[%c0_3, %c0_4] : memref<8x1xf32, #tpu.memory_space<vmem>>, vector<8x1xf32>
    %5 = vector.broadcast %4 : vector<8x1xf32> to vector<8x256xf32>
    %6 = arith.addf %3, %5 : vector<8x256xf32>
    %c0_5 = arith.constant 0 : index
    %c0_6 = arith.constant 0 : index
    %7 = vector.load %arg5[%c0_5, %c0_6] : memref<8x256xf32, #tpu.memory_space<vmem>>, vector<8x256xf32>
    tpu.vector_store %arg5[%c0_5, %c0_6], %6 {strides = array<i32>} : memref<8x256xf32, #tpu.memory_space<vmem>>, vector<8x256xf32>,
    return
  }
  func.func @transform_0(%arg0: i32, %arg1: i32) -> (i32, i32) {
    %c0_i32 = arith.constant 0 : i32
    %c0_i32_0 = arith.constant 0 : i32
    return %arg0, %c0_i32 : i32, i32
  }
  func.func @transform_1(%arg0: i32, %arg1: i32) -> (i32, i32) {
    %c0_i32 = arith.constant 0 : i32
    %c0_i32_0 = arith.constant 0 : i32
    return %arg0, %c0_i32 : i32, i32
  }
  func.func @transform_2(%arg0: i32, %arg1: i32) -> (i32, i32) {
    %c0_i32 = arith.constant 0 : i32
    return %arg0, %arg1 : i32, i32
  }
  func.func @transform_3(%arg0: i32, %arg1: i32) -> (i32, i32) {
    %c0_i32 = arith.constant 0 : i32
    return %arg0, %arg1 : i32, i32
  }
}

</mosaic_0001>

<llo_original>
// kernel: tpu_custom_call.1
$region0: #{tpu_custom_call.1}
  #allocation0 [shape = 'u32[]', space=smem, size = 0x4, offset = 0x4, fixed_abs, tag = 'smem constant byte address 0x4 - core index']
  #allocation1 [shape = 'u32[144,128]{1,0:T(1,128)}', space=vmem, size = 0x12000, scoped, tag = 'internal scratch']
  %s0 = inlined_call_operand.vmem [shape: f32[8,1], index: 0, kind: input, shape index: {}]
  %s1 = inlined_call_operand.vmem [shape: f32[8,1], index: 1, kind: input, shape index: {}]
  %s2 = inlined_call_operand.vmem [shape: f32[8,256], index: 2, kind: input, shape index: {}]
  %s3 = inlined_call_operand.hbm [shape: f32[8,256], index: 3, kind: output, shape index: {}]
  %s4 = sld [smem:[#allocation0]]
  $region22: #{tpu_custom_call.1} parent=0
    _
  %s6 = ssub.s32 1, %s4
  %s7 = scalar_select 0, %s6, %s4
  $region1: #{tpu_custom_call.1} parent=0
    #allocation2 [shape = 'u8[8192]{0}', space=vmem, size = 0x2000, scoped, tag = 'output window, operand 0, single buffered']
    #allocation3 [shape = 's32[1]{0}', space=sflag, size = 0x4, scoped, tag = 'scoped memory for tpu_custom_call.1']
    %8 = vsyncpa [#allocation3], 0
    // Predicated region
    $region2: #{tpu_custom_call.1} parent=1 // pred_check
      _
    $region3: #{tpu_custom_call.1} parent=1 // pred_check_branch
      %10 = sbr.rel (0) target = $region5
    $region4: #{tpu_custom_call.1} parent=1 // pred_region
      _
    $region5: #{tpu_custom_call.1} parent=1 // pred_fallthru
      _
    // Predicated region
    $region6: #{tpu_custom_call.1} parent=1 // pred_check
      _
    $region7: #{tpu_custom_call.1} parent=1 // pred_check_branch
      %12 = sbr.rel (0) target = $region9
    $region8: #{tpu_custom_call.1} parent=1 // pred_region
      _
    $region9: #{tpu_custom_call.1} parent=1 // pred_fallthru
      _
    // Predicated region
    $region10: #{tpu_custom_call.1} parent=1 // pred_check
      _
    $region11: #{tpu_custom_call.1} parent=1 // pred_check_branch
      %14 = sbr.rel (0) target = $region13
    $region12: #{tpu_custom_call.1} parent=1 // pred_region
      _
    $region13: #{tpu_custom_call.1} parent=1 // pred_fallthru
      _
    %v15 = vld [vmem:[%s2] sm:$0xff]
    %v16 = vld [vmem:[%s2 + $0x8] sm:$0xff]
    %v17 = vld [vmem:[%s0] sm:$0xff]
    %19 = vset.pattern.permute.xlu0 0
    %20 = vperm.xlu0 %19, %v17
    %v21 = vpop.permute.xlu0 %20
    %v23 = vmul.f32 %v15, %v21
    %v24 = vmul.f32 %v16, %v21
    %v25 = vld [vmem:[%s1] sm:$0xff]
    %27 = vset.pattern.permute.xlu0 0
    %28 = vperm.xlu0 %27, %v25
    %v29 = vpop.permute.xlu0 %28
    %v31 = vadd.f32 %v23, %v29
    %v32 = vadd.f32 %v24, %v29
    %33 = vst [vmem:[#allocation2] sm:$0xff] %v31
    %34 = vst [vmem:[#allocation2 + $0x8] sm:$0xff] %v32
    // Predicated region
    $region14: #{tpu_custom_call.1} parent=1 // pred_check
      _
    $region15: #{tpu_custom_call.1} parent=1 // pred_check_branch
      %36 = sbr.rel (0) target = $region17
    $region16: #{tpu_custom_call.1} parent=1 // pred_region
      %s38 = ssub.s32 256, 256
      %39 = vsyncadd [#allocation3], %s38
      %s41 = sshll.u32 [#allocation2], 4
      %s42 = int_to_ptr.vmem [resolvable:$true] %s41
      %44 = dma.vmem_to_hbm [thread:$0]  %s42, 256, %s3, [#allocation3]
    $region17: #{tpu_custom_call.1} parent=1 // pred_fallthru
      _
    // Predicated region
    $region18: #{tpu_custom_call.1} parent=1 // pred_check
      _
    $region19: #{tpu_custom_call.1} parent=1 // pred_check_branch
      %46 = sbr.rel (0) target = $region21
    $region20: #{tpu_custom_call.1} parent=1 // pred_region
      %47 = dma.done [#allocation3], 256
    $region21: #{tpu_custom_call.1} parent=1 // pred_fallthru
      _
    %48 = vsyncpa [#allocation3], 1

</llo_original>
